<compile_context>
chip_gen: v6e
topology: v6e:2x2x1
jax: 0.10.0
libtpu: 0.0.40
codegen_flags: <defaults>
</compile_context>

<pallas_src>
import jax
import jax.numpy as jnp
from jax import lax
from jax.experimental import pallas as pl
from jax.experimental.pallas import tpu as pltpu

IGNORE_INDEX = 255


def _round_up(x, m):
    return (x + m - 1) // m * m


def _vmem_capacity_bytes():
    try:
        info = pltpu.get_tpu_info()
        cap = getattr(info, "vmem_capacity_bytes", None)
        if cap:
            return int(cap)
    except Exception:
        pass
    return 64 * 1024 * 1024  # conservative: v7x per-TensorCore VMEM


# ---------------------------------------------------------------------------
# Dense path: HW % 128 == 0.
# ---------------------------------------------------------------------------
def _make_dense_kernel(c, tp, rows, inner, ignore_index, need_mask, p_dtype):
    """Kernel closure over static shapes / flags."""

    def kernel(p_ref, t_ref, sum_ref, cnt_ref, sum_acc, cnt_acc):
        o = pl.program_id(1)
        i = pl.program_id(2)

        @pl.when(i == 0)
        def _():
            sum_acc[...] = jnp.zeros_like(sum_acc)
            cnt_acc[...] = jnp.zeros_like(cnt_acc)

        t = t_ref[0].astype(jnp.int32)                    # (TP, 128)

        # p[target] via a chain of full-(8,128)-vreg selects over the class
        # axis, in the input dtype (exact: exactly one class matches/pixel).
        sel = jnp.zeros((tp, 128), p_dtype)
        for ci in range(c):                               # C is small & static
            sel = jnp.where(t == ci, p_ref[ci], sel)
        sel = sel.astype(jnp.float32)

        valid = t != ignore_index
        if need_mask:
            # Last tile (and the clamped duplicate tile from the parallel
            # pixel split) hangs past the real row range -> mask it out.
            tidx = o * inner + i
            row = lax.broadcasted_iota(jnp.int32, (tp, 128), 0)
            valid = jnp.logical_and(valid, tidx * tp + row < rows)

        # log(1.0) == 0 for masked lanes -> contributes nothing to the sum.
        sum_acc[...] += jnp.log(jnp.where(valid, sel, 1.0))
        cnt_acc[...] += valid.astype(jnp.float32)

        # Single cross-lane reduction per (n, outer-chunk).
        @pl.when(i == pl.num_programs(2) - 1)
        def _():
            sum_ref[...] = jnp.sum(sum_acc[...]).reshape(1, 1)
            cnt_ref[...] = jnp.sum(cnt_acc[...]).reshape(1, 1)

    return kernel


def _dense_rows_per_tile(rows, c, p_item, t_item, cap):
    """Pixel-rows per tile with padding-aware VMEM accounting."""
    prob_target = (16 if cap > (64 << 20) else 12) * 1024 * 1024
    row_prob = c * 128 * p_item
    # 2 x double-buffered prob + target blocks, plus the two f32 accumulators.
    row_total = 2 * row_prob + 2 * 128 * t_item + 2 * 128 * 4
    budget = min(cap // 2, 48 << 20)
    tp = min(prob_target // row_prob, budget // row_total)
    if tp >= rows:
        return rows                      # single-tile (full-extent block)
    if tp >= 32:
        return (tp // 32) * 32           # keeps uint8-target tiling legal too
    return max(8, (tp // 8) * 8)


def _dense_path(inputs, targets, n, c, hw, rows_per_tile=None):
    rows = hw // 128
    p_item = jnp.dtype(inputs.dtype).itemsize
    cap = _vmem_capacity_bytes()

    tp = (rows_per_tile if rows_per_tile is not None
          else _dense_rows_per_tile(rows, c, p_item, 4, cap))
    tp = min(tp, rows)

    # Targets: keep uint8 (1 B/px HBM traffic) when its (32,128) tiling is
    # legal for this block shape; otherwise carry int32.
    if targets.dtype == jnp.uint8 and (tp == rows or tp % 32 == 0):
        t = targets.reshape(n, 1, rows, 128)
        t_item = 1
    else:
        t = targets.reshape(n, 1, rows, 128).astype(jnp.int32)
        t_item = 4

    x = inputs.reshape(n, c, rows, 128)                   # free reshape

    num_tiles = pl.cdiv(rows, tp)
    # Extra parallel pixel axis so a second TensorCore (v7x) has work at N==1.
    p_outer = 2 if (n == 1 and num_tiles >= 2) else 1
    inner = pl.cdiv(num_tiles, p_outer)
    need_mask = (p_outer * inner * tp) != rows

    def _tile_idx(o, i):
        # Clamp: the parallel split can point one tile past the end; the
        # kernel masks that (duplicate) tile's contribution to zero.
        return jnp.minimum(o * inner + i, num_tiles - 1)

    p_spec = pl.BlockSpec((None, c, tp, 128),
                          lambda nn, o, i: (nn, 0, _tile_idx(o, i), 0))
    t_spec = pl.BlockSpec((None, 1, tp, 128),
                          lambda nn, o, i: (nn, 0, _tile_idx(o, i), 0))
    o_spec = pl.BlockSpec((None, None, 1, 1), lambda nn, o, i: (nn, o, 0, 0))

    footprint = (2 * (c * tp * 128 * p_item + tp * 128 * t_item)
                 + 2 * _round_up(tp, 8) * 128 * 4 + (1 << 20))
    vmem_limit = int(min(max(footprint + (4 << 20), 16 << 20), 0.75 * cap))

    sums, cnts = pl.pallas_call(
        _make_dense_kernel(c, tp, rows, inner, IGNORE_INDEX, need_mask,
                           inputs.dtype),
        out_shape=(jax.ShapeDtypeStruct((n, p_outer, 1, 1), jnp.float32),
                   jax.ShapeDtypeStruct((n, p_outer, 1, 1), jnp.float32)),
        grid_spec=pltpu.PrefetchScalarGridSpec(
            num_scalar_prefetch=0,
            grid=(n, p_outer, inner),
            in_specs=[p_spec, t_spec],
            out_specs=(o_spec, o_spec),
            scratch_shapes=[pltpu.VMEM((tp, 128), jnp.float32),
                            pltpu.VMEM((tp, 128), jnp.float32)]),
        compiler_params=pltpu.CompilerParams(
            dimension_semantics=("parallel", "parallel", "arbitrary"),
            vmem_limit_bytes=vmem_limit),
    )(x, t)

    return -jnp.sum(sums) / jnp.sum(cnts)


# ---------------------------------------------------------------------------
# Fallback path: HW % 128 != 0 (lane-dense (C, HW) layout, masked tail).
# ---------------------------------------------------------------------------
def _make_lane_kernel(hw, tl, ignore_index):

    def kernel(p_ref, t_ref, sum_ref, cnt_ref, sum_acc, cnt_acc):
        ti = pl.program_id(1)

        @pl.when(ti == 0)
        def _():
            sum_acc[...] = jnp.zeros_like(sum_acc)
            cnt_acc[...] = jnp.zeros_like(cnt_acc)

        p = p_ref[...]                                    # (C, TL) native dtype
        t = t_ref[...]                                    # (1, TL) int32
        c = p.shape[0]

        class_ids = lax.broadcasted_iota(jnp.int32, (c, tl), 0)
        sel = jnp.sum(jnp.where(class_ids == t, p, jnp.zeros((), p.dtype)),
                      axis=0, keepdims=True).astype(jnp.float32)   # (1, TL)

        if hw % tl == 0:                                  # static elision
            valid = t != ignore_index
        else:
            pix = ti * tl + lax.broadcasted_iota(jnp.int32, (1, tl), 1)
            valid = jnp.logical_and(t != ignore_index, pix < hw)

        sum_acc[...] += jnp.log(jnp.where(valid, sel, 1.0))
        cnt_acc[...] += valid.astype(jnp.float32)

        @pl.when(ti == pl.num_programs(1) - 1)
        def _():
            sum_ref[...] = jnp.sum(sum_acc[...]).reshape(1, 1)
            cnt_ref[...] = jnp.sum(cnt_acc[...]).reshape(1, 1)

    return kernel


def _lane_tile(hw, c, p_item, cap):
    prob_target = (16 if cap > (64 << 20) else 12) * 1024 * 1024
    sublanes = 32 // p_item                               # 8 f32 / 16 bf16
    c_pad = _round_up(c, sublanes)
    # padding-aware per-pixel footprint: 2-buf probs + (8,TL)-padded int32
    # targets + one extra prob block (select temp) + two (8,TL) f32 accs.
    per_px = 3 * c_pad * p_item + 2 * 8 * 4 + 2 * 8 * 4
    budget = min(cap // 2, 48 << 20)
    tl = min(prob_target // (c_pad * p_item), budget // per_px)
    tl = max(128, (tl // 128) * 128)
    if hw <= tl:
        return hw                                         # block == full dim
    return tl


def _lane_path(inputs, targets, n, c, hw):
    p_item = jnp.dtype(inputs.dtype).itemsize
    cap = _vmem_capacity_bytes()
    tl = _lane_tile(hw, c, p_item, cap)
    num_tiles = pl.cdiv(hw, tl)

    x = inputs.reshape(n, c, hw)
    t = targets.reshape(n, 1, hw).astype(jnp.int32)

    c_pad = _round_up(c, 32 // p_item)
    footprint = 3 * c_pad * tl * p_item + 2 * 8 * tl * 4 + 2 * 8 * tl * 4 + (1 << 20)
    vmem_limit = int(min(max(footprint + (4 << 20), 16 << 20), 0.75 * cap))

    sums, cnts = pl.pallas_call(
        _make_lane_kernel(hw, tl, IGNORE_INDEX),
        out_shape=(jax.ShapeDtypeStruct((n, 1, 1), jnp.float32),
                   jax.ShapeDtypeStruct((n, 1, 1), jnp.float32)),
        grid_spec=pltpu.PrefetchScalarGridSpec(
            num_scalar_prefetch=0,
            grid=(n, num_tiles),
            in_specs=[pl.BlockSpec((None, c, tl), lambda nn, i: (nn, 0, i)),
                      pl.BlockSpec((None, 1, tl), lambda nn, i: (nn, 0, i))],
            out_specs=(pl.BlockSpec((None, 1, 1), lambda nn, i: (nn, 0, 0)),
                       pl.BlockSpec((None, 1, 1), lambda nn, i: (nn, 0, 0))),
            scratch_shapes=[pltpu.VMEM((1, tl), jnp.float32),
                            pltpu.VMEM((1, tl), jnp.float32)]),
        compiler_params=pltpu.CompilerParams(
            dimension_semantics=("parallel", "arbitrary"),
            vmem_limit_bytes=vmem_limit),
    )(x, t)

    return -jnp.sum(sums) / jnp.sum(cnts)


# ---------------------------------------------------------------------------
# Public entry point (equivalent to CrossEntropyLoss2d.forward).
# ---------------------------------------------------------------------------
def cross_entropy_loss_2d(inputs, targets):
    """inputs: (N, C, H, W) probabilities; targets: (N, H, W) int class ids.

    Equivalent to nn.NLLLoss(weight=None, size_average=True, ignore_index=255)
    applied to torch.log(inputs): mean over non-ignored pixels of -log p[target].
    Returns NaN if every pixel is ignore_index (matches PyTorch 0/0 behavior).
    """
    n, c, h, w = inputs.shape
    hw = h * w
    if hw % 128 == 0:
        return _dense_path(inputs, targets, n, c, hw)
    return _lane_path(inputs, targets, n, c, hw)


def _reference(inputs, targets):
    n, c, h, w = inputs.shape
    x = jnp.transpose(inputs, (0, 2, 3, 1)).reshape(-1, c).astype(jnp.float32)
    t = targets.reshape(-1).astype(jnp.int32)
    valid = t != IGNORE_INDEX
    t_safe = jnp.where(valid, t, 0)
    logp = jnp.log(jnp.take_along_axis(x, t_safe[:, None], axis=1)[:, 0])
    return -jnp.sum(jnp.where(valid, logp, 0.0)) / jnp.sum(valid.astype(jnp.float32))


if __name__ == "__main__":
    key = jax.random.PRNGKey(0)
    k1, k2, k3, k4, k5 = jax.random.split(key, 5)

    # Case 1: dense path (HW % 128 == 0), int32 targets with ignored pixels.
    n, c, h, w = 2, 4, 16, 16
    probs = jax.nn.softmax(jax.random.normal(k1, (n, c, h, w), jnp.float32), axis=1)
    tgt = jax.random.randint(k2, (n, h, w), 0, c, dtype=jnp.int32)
    tgt = jnp.where(jax.random.bernoulli(k3, 0.1, (n, h, w)), IGNORE_INDEX, tgt)
    out = jax.block_until_ready(cross_entropy_loss_2d(probs, tgt))
    ref = _reference(probs, tgt)
    assert jnp.allclose(out, ref, rtol=1e-5, atol=1e-6), (out, ref)

    # Case 2: dense path, uint8 targets (1 B/px HBM traffic path).
    out_u8 = jax.block_until_ready(cross_entropy_loss_2d(probs, tgt.astype(jnp.uint8)))
    assert jnp.allclose(out_u8, ref, rtol=1e-5, atol=1e-6), (out_u8, ref)

    # Case 3: lane-path fallback (HW % 128 != 0).
    n2, c2, h2, w2 = 2, 5, 10, 10
    probs2 = jax.nn.softmax(jax.random.normal(k4, (n2, c2, h2, w2), jnp.float32), axis=1)
    tgt2 = jax.random.randint(k5, (n2, h2, w2), 0, c2, dtype=jnp.int32)
    out2 = jax.block_until_ready(cross_entropy_loss_2d(probs2, tgt2))
    ref2 = _reference(probs2, tgt2)
    assert jnp.allclose(out2, ref2, rtol=1e-5, atol=1e-6), (out2, ref2)

    # Case 4: dense path with forced small tiles -> exercises the parallel
    # pixel super-chunk axis (p_outer=2), the tail mask, and the clamped tile.
    n3, c3, h3, w3 = 1, 3, 16, 136       # HW = 2176 = 17 rows of 128 pixels
    probs3 = jax.nn.softmax(jax.random.normal(k1, (n3, c3, h3, w3), jnp.float32), axis=1)
    tgt3 = jax.random.randint(k2, (n3, h3, w3), 0, c3, dtype=jnp.int32)
    tgt3 = jnp.where(jax.random.bernoulli(k3, 0.1, (n3, h3, w3)), IGNORE_INDEX, tgt3)
    out3 = jax.block_until_ready(
        _dense_path(probs3, tgt3, n3, c3, h3 * w3, rows_per_tile=8))
    ref3 = _reference(probs3, tgt3)
    assert jnp.allclose(out3, ref3, rtol=1e-5, atol=1e-6), (out3, ref3)

    print("KERNEL_OK")
</pallas_src>

<mosaic_0001>
module attributes {stable_mosaic.version = 11 : i64} {
  func.func @kernel(%arg0: i32, %arg1: i32, %arg2: i32, %arg3: memref<1x4x2x128xf32, #tpu.memory_space<vmem>>, %arg4: memref<1x1x2x128xi32, #tpu.memory_space<vmem>>, %arg5: memref<1x1x1x1xf32, #tpu.memory_space<vmem>>, %arg6: memref<1x1x1x1xf32, #tpu.memory_space<vmem>>, %arg7: memref<2x128xf32, #tpu.memory_space<vmem>>, %arg8: memref<2x128xf32, #tpu.memory_space<vmem>>) attributes {dimension_semantics = [#tpu.dimension_semantics<parallel>, #tpu.dimension_semantics<parallel>, #tpu.dimension_semantics<arbitrary>], iteration_bounds = array<i64: 2, 1, 1>, scalar_prefetch = 0 : i64, scratch_operands = 2 : i64, tpu.core_type = #tpu.core_type<tc>, window_params = [{transform_indices = @transform_0, window_bounds = array<i64: 1, 4, 2, 128>}, {transform_indices = @transform_1, window_bounds = array<i64: 1, 1, 2, 128>}, {transform_indices = @transform_2, window_bounds = array<i64: 1, 1, 1, 1>}, {transform_indices = @transform_3, window_bounds = array<i64: 1, 1, 1, 1>}]} {
    %c0_i32 = arith.constant 0 : i32
    %0 = arith.cmpi eq, %arg2, %c0_i32 : i32
    %1 = arith.extui %0 : i1 to i32
    %c0_i32_0 = arith.constant 0 : i32
    %2 = arith.cmpi ne, %1, %c0_i32_0 : i32
    scf.if %2 {
      %cst_29 = arith.constant 0.000000e+00 : f32
      %42 = vector.broadcast %cst_29 : f32 to vector<2x128xf32>
      %c0_30 = arith.constant 0 : index
      %c0_31 = arith.constant 0 : index
      %43 = vector.load %arg7[%c0_30, %c0_31] : memref<2x128xf32, #tpu.memory_space<vmem>>, vector<2x128xf32>
      tpu.vector_store %arg7[%c0_30, %c0_31], %42 {strides = array<i32>} : memref<2x128xf32, #tpu.memory_space<vmem>>, vector<2x128xf32>,
      %cst_32 = arith.constant 0.000000e+00 : f32
      %44 = vector.broadcast %cst_32 : f32 to vector<2x128xf32>
      %c0_33 = arith.constant 0 : index
      %c0_34 = arith.constant 0 : index
      %45 = vector.load %arg8[%c0_33, %c0_34] : memref<2x128xf32, #tpu.memory_space<vmem>>, vector<2x128xf32>
      tpu.vector_store %arg8[%c0_33, %c0_34], %44 {strides = array<i32>} : memref<2x128xf32, #tpu.memory_space<vmem>>, vector<2x128xf32>,
    } else {
    }
    %c0 = arith.constant 0 : index
    %c0_1 = arith.constant 0 : index
    %c0_2 = arith.constant 0 : index
    %c0_3 = arith.constant 0 : index
    %3 = vector.load %arg4[%c0, %c0_1, %c0_2, %c0_3] : memref<1x1x2x128xi32, #tpu.memory_space<vmem>>, vector<1x1x2x128xi32>
    %4 = vector.shape_cast %3 : vector<1x1x2x128xi32> to vector<2x128xi32>
    %cst = arith.constant 0.000000e+00 : f32
    %5 = vector.broadcast %cst : f32 to vector<2x128xf32>
    %c0_i32_4 = arith.constant 0 : i32
    %6 = vector.broadcast %c0_i32_4 : i32 to vector<2x128xi32>
    %7 = arith.cmpi eq, %4, %6 : vector<2x128xi32>
    %c0_5 = arith.constant 0 : index
    %c0_6 = arith.constant 0 : index
    %c0_7 = arith.constant 0 : index
    %c0_8 = arith.constant 0 : index
    %8 = vector.load %arg3[%c0_5, %c0_6, %c0_7, %c0_8] : memref<1x4x2x128xf32, #tpu.memory_space<vmem>>, vector<1x1x2x128xf32>
    %9 = vector.shape_cast %8 : vector<1x1x2x128xf32> to vector<2x128xf32>
    %10 = arith.select %7, %9, %5 : vector<2x128xi1>, vector<2x128xf32>
    %c1_i32 = arith.constant 1 : i32
    %11 = vector.broadcast %c1_i32 : i32 to vector<2x128xi32>
    %12 = arith.cmpi eq, %4, %11 : vector<2x128xi32>
    %c0_9 = arith.constant 0 : index
    %c1 = arith.constant 1 : index
    %c0_10 = arith.constant 0 : index
    %c0_11 = arith.constant 0 : index
    %13 = vector.load %arg3[%c0_9, %c1, %c0_10, %c0_11] : memref<1x4x2x128xf32, #tpu.memory_space<vmem>>, vector<1x1x2x128xf32>
    %14 = vector.shape_cast %13 : vector<1x1x2x128xf32> to vector<2x128xf32>
    %15 = arith.select %12, %14, %10 : vector<2x128xi1>, vector<2x128xf32>
    %c2_i32 = arith.constant 2 : i32
    %16 = vector.broadcast %c2_i32 : i32 to vector<2x128xi32>
    %17 = arith.cmpi eq, %4, %16 : vector<2x128xi32>
    %c0_12 = arith.constant 0 : index
    %c2 = arith.constant 2 : index
    %c0_13 = arith.constant 0 : index
    %c0_14 = arith.constant 0 : index
    %18 = vector.load %arg3[%c0_12, %c2, %c0_13, %c0_14] : memref<1x4x2x128xf32, #tpu.memory_space<vmem>>, vector<1x1x2x128xf32>
    %19 = vector.shape_cast %18 : vector<1x1x2x128xf32> to vector<2x128xf32>
    %20 = arith.select %17, %19, %15 : vector<2x128xi1>, vector<2x128xf32>
    %c3_i32 = arith.constant 3 : i32
    %21 = vector.broadcast %c3_i32 : i32 to vector<2x128xi32>
    %22 = arith.cmpi eq, %4, %21 : vector<2x128xi32>
    %c0_15 = arith.constant 0 : index
    %c3 = arith.constant 3 : index
    %c0_16 = arith.constant 0 : index
    %c0_17 = arith.constant 0 : index
    %23 = vector.load %arg3[%c0_15, %c3, %c0_16, %c0_17] : memref<1x4x2x128xf32, #tpu.memory_space<vmem>>, vector<1x1x2x128xf32>
    %24 = vector.shape_cast %23 : vector<1x1x2x128xf32> to vector<2x128xf32>
    %25 = arith.select %22, %24, %20 : vector<2x128xi1>, vector<2x128xf32>
    %c255_i32 = arith.constant 255 : i32
    %26 = vector.broadcast %c255_i32 : i32 to vector<2x128xi32>
    %27 = arith.cmpi ne, %4, %26 : vector<2x128xi32>
    %c0_18 = arith.constant 0 : index
    %c0_19 = arith.constant 0 : index
    %28 = vector.load %arg7[%c0_18, %c0_19] : memref<2x128xf32, #tpu.memory_space<vmem>>, vector<2x128xf32>
    %cst_20 = arith.constant 1.000000e+00 : f32
    %29 = vector.broadcast %cst_20 : f32 to vector<2x128xf32>
    %30 = arith.select %27, %25, %29 : vector<2x128xi1>, vector<2x128xf32>
    %31 = math.log %30 : vector<2x128xf32>
    %32 = arith.addf %28, %31 : vector<2x128xf32>
    %c0_21 = arith.constant 0 : index
    %c0_22 = arith.constant 0 : index
    %33 = vector.load %arg7[%c0_21, %c0_22] : memref<2x128xf32, #tpu.memory_space<vmem>>, vector<2x128xf32>
    tpu.vector_store %arg7[%c0_21, %c0_22], %32 {strides = array<i32>} : memref<2x128xf32, #tpu.memory_space<vmem>>, vector<2x128xf32>,
    %c0_23 = arith.constant 0 : index
    %c0_24 = arith.constant 0 : index
    %34 = vector.load %arg8[%c0_23, %c0_24] : memref<2x128xf32, #tpu.memory_space<vmem>>, vector<2x128xf32>
    %35 = arith.extui %27 : vector<2x128xi1> to vector<2x128xi32>
    %36 = arith.sitofp %35 : vector<2x128xi32> to vector<2x128xf32>
    %37 = arith.addf %34, %36 : vector<2x128xf32>
    %c0_25 = arith.constant 0 : index
    %c0_26 = arith.constant 0 : index
    %38 = vector.load %arg8[%c0_25, %c0_26] : memref<2x128xf32, #tpu.memory_space<vmem>>, vector<2x128xf32>
    tpu.vector_store %arg8[%c0_25, %c0_26], %37 {strides = array<i32>} : memref<2x128xf32, #tpu.memory_space<vmem>>, vector<2x128xf32>,
    %c0_i32_27 = arith.constant 0 : i32
    %39 = arith.cmpi eq, %arg2, %c0_i32_27 : i32
    %40 = arith.extui %39 : i1 to i32
    %c0_i32_28 = arith.constant 0 : i32
    %41 = arith.cmpi ne, %40, %c0_i32_28 : i32
    scf.if %41 {
      %c0_29 = arith.constant 0 : index
      %c0_30 = arith.constant 0 : index
      %42 = vector.load %arg7[%c0_29, %c0_30] : memref<2x128xf32, #tpu.memory_space<vmem>>, vector<2x128xf32>
      %43 = vector.shape_cast %42 : vector<2x128xf32> to vector<1x2x128xf32>
      %cst_31 = arith.constant dense<0.000000e+00> : vector<1xf32>
      %44 = vector.multi_reduction <add>, %43, %cst_31 [1, 2] : vector<1x2x128xf32> to vector<1xf32>
      %45 = vector.shape_cast %44 : vector<1xf32> to vector<1x1x1xf32>
      %46 = vector.extract %45[0, 0, 0] : f32 from vector<1x1x1xf32>
      %47 = vector.broadcast %46 : f32 to vector<1x1xf32>
      %c0_32 = arith.constant 0 : index
      %c0_33 = arith.constant 0 : index
      %c0_34 = arith.constant 0 : index
      %c0_35 = arith.constant 0 : index
      %48 = vector.load %arg5[%c0_32, %c0_33, %c0_34, %c0_35] : memref<1x1x1x1xf32, #tpu.memory_space<vmem>>, vector<1x1x1x1xf32>
      %49 = vector.shape_cast %48 : vector<1x1x1x1xf32> to vector<1x1xf32>
      %50 = vector.shape_cast %47 : vector<1x1xf32> to vector<1x1x1x1xf32>
      tpu.vector_store %arg5[%c0_32, %c0_33, %c0_34, %c0_35], %50 {strides = array<i32>} : memref<1x1x1x1xf32, #tpu.memory_space<vmem>>, vector<1x1x1x1xf32>,
      %c0_36 = arith.constant 0 : index
      %c0_37 = arith.constant 0 : index
      %51 = vector.load %arg8[%c0_36, %c0_37] : memref<2x128xf32, #tpu.memory_space<vmem>>, vector<2x128xf32>
      %52 = vector.shape_cast %51 : vector<2x128xf32> to vector<1x2x128xf32>
      %cst_38 = arith.constant dense<0.000000e+00> : vector<1xf32>
      %53 = vector.multi_reduction <add>, %52, %cst_38 [1, 2] : vector<1x2x128xf32> to vector<1xf32>
      %54 = vector.shape_cast %53 : vector<1xf32> to vector<1x1x1xf32>
      %55 = vector.extract %54[0, 0, 0] : f32 from vector<1x1x1xf32>
      %56 = vector.broadcast %55 : f32 to vector<1x1xf32>
      %c0_39 = arith.constant 0 : index
      %c0_40 = arith.constant 0 : index
      %c0_41 = arith.constant 0 : index
      %c0_42 = arith.constant 0 : index
      %57 = vector.load %arg6[%c0_39, %c0_40, %c0_41, %c0_42] : memref<1x1x1x1xf32, #tpu.memory_space<vmem>>, vector<1x1x1x1xf32>
      %58 = vector.shape_cast %57 : vector<1x1x1x1xf32> to vector<1x1xf32>
      %59 = vector.shape_cast %56 : vector<1x1xf32> to vector<1x1x1x1xf32>
      tpu.vector_store %arg6[%c0_39, %c0_40, %c0_41, %c0_42], %59 {strides = array<i32>} : memref<1x1x1x1xf32, #tpu.memory_space<vmem>>, vector<1x1x1x1xf32>,
    } else {
    }
    return
  }
  func.func @transform_0(%arg0: i32, %arg1: i32, %arg2: i32) -> (i32, i32, i32, i32) {
    %c1_i32 = arith.constant 1 : i32
    %0 = arith.muli %arg1, %c1_i32 : i32
    %1 = arith.addi %0, %arg2 : i32
    %c0_i32 = arith.constant 0 : i32
    %2 = arith.minsi %1, %c0_i32 : i32
    %c0_i32_0 = arith.constant 0 : i32
    %c0_i32_1 = arith.constant 0 : i32
    %c0_i32_2 = arith.constant 0 : i32
    return %arg0, %c0_i32_0, %2, %c0_i32_1 : i32, i32, i32, i32
  }
  func.func @transform_1(%arg0: i32, %arg1: i32, %arg2: i32) -> (i32, i32, i32, i32) {
    %c1_i32 = arith.constant 1 : i32
    %0 = arith.muli %arg1, %c1_i32 : i32
    %1 = arith.addi %0, %arg2 : i32
    %c0_i32 = arith.constant 0 : i32
    %2 = arith.minsi %1, %c0_i32 : i32
    %c0_i32_0 = arith.constant 0 : i32
    %c0_i32_1 = arith.constant 0 : i32
    %c0_i32_2 = arith.constant 0 : i32
    return %arg0, %c0_i32_0, %2, %c0_i32_1 : i32, i32, i32, i32
  }
  func.func @transform_2(%arg0: i32, %arg1: i32, %arg2: i32) -> (i32, i32, i32, i32) {
    %c0_i32 = arith.constant 0 : i32
    %c0_i32_0 = arith.constant 0 : i32
    %c0_i32_1 = arith.constant 0 : i32
    return %arg0, %arg1, %c0_i32, %c0_i32_0 : i32, i32, i32, i32
  }
  func.func @transform_3(%arg0: i32, %arg1: i32, %arg2: i32) -> (i32, i32, i32, i32) {
    %c0_i32 = arith.constant 0 : i32
    %c0_i32_0 = arith.constant 0 : i32
    %c0_i32_1 = arith.constant 0 : i32
    return %arg0, %arg1, %c0_i32, %c0_i32_0 : i32, i32, i32, i32
  }
}

</mosaic_0001>

<llo_original>
// kernel: tpu_custom_call.1
$region0: #{tpu_custom_call.1}
  #allocation0 [shape = 'u32[]', space=smem, size = 0x4, offset = 0x4, fixed_abs, tag = 'smem constant byte address 0x4 - core index']
  #allocation1 [shape = 'u32[144,128]{1,0:T(1,128)}', space=vmem, size = 0x12000, scoped, tag = 'internal scratch']
  #allocation2 [shape = 'f32[2,128]{1,0:T(2,128)}', space=vmem, size = 0x400, scoped, tag = 'scratch operand']
  #allocation3 [shape = 'f32[2,128]{1,0:T(2,128)}', space=vmem, size = 0x400, scoped, tag = 'scratch operand']
  %s0 = inlined_call_operand.hbm [shape: f32[2,4,2,128], index: 0, kind: input, shape index: {}]
  %s1 = inlined_call_operand.hbm [shape: s32[2,1,2,128], index: 1, kind: input, shape index: {}]
  %s2 = inlined_call_operand.vmem [shape: f32[2,1,1,1], index: 2, kind: output, shape index: {0}]
  %s3 = inlined_call_operand.vmem [shape: f32[2,1,1,1], index: 3, kind: output, shape index: {1}]
  %4 = xla_tuple %s2, %s3
  %s5 = sld [smem:[#allocation0]]
  $region65: #{tpu_custom_call.1} parent=0
    _
  %s7 = ssub.s32 1, %s5
  %s8 = scalar_select 0, %s7, %s5
  $region1: #{tpu_custom_call.1} parent=0
    #allocation4 [shape = 'u8[8192]{0}', space=vmem, size = 0x2000, scoped, tag = 'input window, operand 0']
    #allocation5 [shape = 's32[2]{0}', space=sflag, size = 0x8, scoped, tag = 'scoped memory for tpu_custom_call.1']
    #allocation6 [shape = 'u8[2048]{0}', space=vmem, size = 0x800, scoped, tag = 'input window, operand 1']
    #allocation7 [shape = 's32[2]{0}', space=sflag, size = 0x8, scoped, tag = 'scoped memory for tpu_custom_call.1']
    %9 = vsyncpa [#allocation5], 0
    %s10 = scalar_lea.sflag [#allocation5], 1
    %11 = vsyncpa %s10, 0
    %12 = vsyncpa [#allocation7], 0
    %s13 = scalar_lea.sflag [#allocation7], 1
    %14 = vsyncpa %s13, 0
    loop: start=0, step=1, limit=4
    $region2: #{tpu_custom_call.1} parent=1 // loop_pre_header
      _
    $region3: #{tpu_custom_call.1} parent=1 // loop_header
      %s16 = sphi 0, %s20
      %p17 = scmp.ge.s32.totalorder %s16, 4
      %s23 = sphi 0, %s42
      %s24 = sphi 0, %s38
      %s25 = sphi 0, %s34
      %s26 = sphi 0, %s23
      %s27 = sphi 0, %s24
      %s28 = sphi 0, %s25
      %s29 = sphi 0, %s26
      %s30 = sphi 0, %s27
      %s31 = sphi 0, %s28
      %s53 = sphi 0, %s55
      %s56 = sphi 0, %s53
      %s57 = sphi 0, %s56
      %s73 = sphi 0, %s57
      %s87 = sphi 0, %s89
      %s90 = sphi 0, %s87
      %s91 = sphi 0, %s90
      %s107 = sphi 0, %s91
      %s115 = sphi 0, %s117
      %s118 = sphi 0, %s115
      %s119 = sphi 0, %s118
      %s135 = sphi 0, %s119
      %s143 = sphi 0, %s145
      %s146 = sphi 0, %s143
      %s147 = sphi 0, %s146
      %s163 = sphi 0, %s147
    $region4: #{tpu_custom_call.1} parent=1 // loop_header_branch
      %19 = sbr.rel (%p17) target = $region8
    $region5: #{tpu_custom_call.1} parent=1 // loop_body
      %s21 = ssub.s32 %s16, 1
      %s22 = ssub.s32 %s16, 2
      %s32 = sadd.s32 1, %s25
      %p33 = scmp.ge.s32.totalorder %s32, 1
      %s34 = scalar_select %p33, 0, %s32
      %s35 = sadd.s32 1, %s24
      %s36 = scalar_select %p33, %s35, %s24
      %p37 = scmp.ge.s32.totalorder %s36, 1
      %s38 = scalar_select %p37, 0, %s36
      %s39 = sadd.s32 1, %s23
      %s40 = scalar_select %p37, %s39, %s23
      %p41 = scmp.ge.s32.totalorder %s40, 2
      %s42 = scalar_select %p41, 0, %s40
      %s43 = sadd.s32 %s24, %s25
      %p44 = scmp.lt.s32.totalorder %s43, 0
      %s45 = scalar_select %p44, %s43, 0
      %s46 = sadd.s32 %s38, %s34
      %p47 = scmp.lt.s32.totalorder %s46, 0
      %s48 = scalar_select %p47, %s46, 0
      %s49 = ssub.s32 %s23, %s42
      %s50 = ssub.s32 %s45, %s48
      %s51 = sor.u32 %s49, %s50
      %p52 = scmp.eq.s32.totalorder %s51, 0
      %s54 = sadd.s32 %s53, 1
      %s55 = scalar_select %p52, %s53, %s54
      %p58 = pneg %p52
      %p59 = scmp.eq.s32.totalorder %s16, 1
      %p60 = por %p58, %p59
      %p61 = scmp.ne.s32.totalorder %s53, %s56
      %p62 = scmp.eq.s32.totalorder %s16, 0
      %p63 = por %p61, %p62
      %p64 = scmp.ne.s32.totalorder %s53, %s56
      %p65 = scmp.eq.s32.totalorder %s21, 1
      %p66 = por %p64, %p65
      %p67 = scmp.ne.s32.totalorder %s56, %s57
      %p68 = scmp.eq.s32.totalorder %s21, 0
      %p69 = por %p67, %p68
      %p70 = scmp.ne.s32.totalorder %s56, %s57
      %p71 = scmp.eq.s32.totalorder %s22, 1
      %p72 = por %p70, %p71
      %p74 = scmp.ne.s32.totalorder %s57, %s73
      %p75 = scmp.eq.s32.totalorder %s22, 0
      %p76 = por %p74, %p75
      %s77 = sadd.s32 %s24, %s25
      %p78 = scmp.lt.s32.totalorder %s77, 0
      %s79 = scalar_select %p78, %s77, 0
      %s80 = sadd.s32 %s38, %s34
      %p81 = scmp.lt.s32.totalorder %s80, 0
      %s82 = scalar_select %p81, %s80, 0
      %s83 = ssub.s32 %s23, %s42
      %s84 = ssub.s32 %s79, %s82
      %s85 = sor.u32 %s83, %s84
      %p86 = scmp.eq.s32.totalorder %s85, 0
      %s88 = sadd.s32 %s87, 1
      %s89 = scalar_select %p86, %s87, %s88
      %p92 = pneg %p86
      %p93 = scmp.eq.s32.totalorder %s16, 1
      %p94 = por %p92, %p93
      %p95 = scmp.ne.s32.totalorder %s87, %s90
      %p96 = scmp.eq.s32.totalorder %s16, 0
      %p97 = por %p95, %p96
      %p98 = scmp.ne.s32.totalorder %s87, %s90
      %p99 = scmp.eq.s32.totalorder %s21, 1
      %p100 = por %p98, %p99
      %p101 = scmp.ne.s32.totalorder %s90, %s91
      %p102 = scmp.eq.s32.totalorder %s21, 0
      %p103 = por %p101, %p102
      %p104 = scmp.ne.s32.totalorder %s90, %s91
      %p105 = scmp.eq.s32.totalorder %s22, 1
      %p106 = por %p104, %p105
      %p108 = scmp.ne.s32.totalorder %s91, %s107
      %p109 = scmp.eq.s32.totalorder %s22, 0
      %p110 = por %p108, %p109
      %s111 = ssub.s32 %s23, %s42
      %s112 = ssub.s32 %s24, %s38
      %s113 = sor.u32 %s111, %s112
      %p114 = scmp.eq.s32.totalorder %s113, 0
      %s116 = sadd.s32 %s115, 1
      %s117 = scalar_select %p114, %s115, %s116
      %p120 = pneg %p114
      %p121 = scmp.eq.s32.totalorder %s16, 1
      %p122 = por %p120, %p121
      %p123 = scmp.ne.s32.totalorder %s115, %s118
      %p124 = scmp.eq.s32.totalorder %s16, 0
      %p125 = por %p123, %p124
      %p126 = scmp.ne.s32.totalorder %s115, %s118
      %p127 = scmp.eq.s32.totalorder %s21, 1
      %p128 = por %p126, %p127
      %p129 = scmp.ne.s32.totalorder %s118, %s119
      %p130 = scmp.eq.s32.totalorder %s21, 0
      %p131 = por %p129, %p130
      %p132 = scmp.ne.s32.totalorder %s118, %s119
      %p133 = scmp.eq.s32.totalorder %s22, 1
      %p134 = por %p132, %p133
      %p136 = scmp.ne.s32.totalorder %s119, %s135
      %p137 = scmp.eq.s32.totalorder %s22, 0
      %p138 = por %p136, %p137
      %s139 = ssub.s32 %s23, %s42
      %s140 = ssub.s32 %s24, %s38
      %s141 = sor.u32 %s139, %s140
      %p142 = scmp.eq.s32.totalorder %s141, 0
      %s144 = sadd.s32 %s143, 1
      %s145 = scalar_select %p142, %s143, %s144
      %p148 = pneg %p142
      %p149 = scmp.eq.s32.totalorder %s16, 1
      %p150 = por %p148, %p149
      %p151 = scmp.ne.s32.totalorder %s143, %s146
      %p152 = scmp.eq.s32.totalorder %s16, 0
      %p153 = por %p151, %p152
      %p154 = scmp.ne.s32.totalorder %s143, %s146
      %p155 = scmp.eq.s32.totalorder %s21, 1
      %p156 = por %p154, %p155
      %p157 = scmp.ne.s32.totalorder %s146, %s147
      %p158 = scmp.eq.s32.totalorder %s21, 0
      %p159 = por %p157, %p158
      %p160 = scmp.ne.s32.totalorder %s146, %s147
      %p161 = scmp.eq.s32.totalorder %s22, 1
      %p162 = por %p160, %p161
      %p164 = scmp.ne.s32.totalorder %s147, %s163
      %p165 = scmp.eq.s32.totalorder %s22, 0
      %p166 = por %p164, %p165
      %p167 = scmp.le.s32.totalorder 1, %s16
      %p168 = scmp.lt.s32.totalorder %s16, 3
      %p169 = pnand %p167, %p168
      %p170 = pneg %p169
      // Predicated region
      $region9: #{tpu_custom_call.1} parent=5 // pred_check
        _
      $region10: #{tpu_custom_call.1} parent=5 // pred_check_branch
        %172 = sbr.rel (%p169) target = $region12
      $region11: #{tpu_custom_call.1} parent=5 // pred_region
        %s173 = ssub.s32 %s16, 1
      $region12: #{tpu_custom_call.1} parent=5 // pred_fallthru
        _
      %p174 = scmp.lt.s32.totalorder %s16, 2
      // Predicated region
      $region13: #{tpu_custom_call.1} parent=5 // pred_check
        %p175 = pneg %p174
      $region14: #{tpu_custom_call.1} parent=5 // pred_check_branch
        %177 = sbr.rel (%p175) target = $region16
      $region15: #{tpu_custom_call.1} parent=5 // pred_region
        // Predicated region
        $region17: #{tpu_custom_call.1} parent=15 // pred_check
          %p178 = pneg %p63
        $region18: #{tpu_custom_call.1} parent=15 // pred_check_branch
          %180 = sbr.rel (%p178) target = $region20
        $region19: #{tpu_custom_call.1} parent=15 // pred_region
          %s181 = sand.u32 %s53, 1
          %s182 = scalar_lea.sflag [#allocation5], %s181
          %s183 = sand.u32 %s53, 1
          %s184 = smul.addr %s183, 8
          %s185 = scalar_lea.vmem [#allocation4], %s184
          %s186 = sadd.s32 %s24, %s25
          %p187 = scmp.lt.s32.totalorder %s186, 0
          %s188 = scalar_select %p187, %s186, 0
          %s190 = ssub.s32 128, 128
          %191 = vsyncadd %s182, %s190
          %s192 = smul.addr %s23, 4
          %s193 = sadd.s32 %s188, %s192
          %s194 = smul.addr %s193, 32
          %s195 = scalar_lea.hbm %s0, %s194
          %s196 = sshll.u32 %s185, 4
          %s197 = int_to_ptr.vmem [resolvable:$true] %s196
          %202 = dma.hbm_to_vmem [thread:$0]  %s195, 128, %s197, %s182, 32, 32, 2
        $region20: #{tpu_custom_call.1} parent=15 // pred_fallthru
          _
        // Predicated region
        $region21: #{tpu_custom_call.1} parent=15 // pred_check
          %p203 = pneg %p97
        $region22: #{tpu_custom_call.1} parent=15 // pred_check_branch
          %205 = sbr.rel (%p203) target = $region24
        $region23: #{tpu_custom_call.1} parent=15 // pred_region
          %s206 = sand.u32 %s87, 1
          %s207 = scalar_lea.sflag [#allocation7], %s206
          %s208 = sand.u32 %s87, 1
          %s209 = smul.addr %s208, 2
          %s210 = scalar_lea.vmem [#allocation6], %s209
          %s211 = sadd.s32 %s24, %s25
          %p212 = scmp.lt.s32.totalorder %s211, 0
          %s213 = scalar_select %p212, %s211, 0
          %s215 = ssub.s32 32, 32
          %216 = vsyncadd %s207, %s215
          %s217 = sadd.s32 %s213, %s23
          %s218 = smul.addr %s217, 32
          %s219 = scalar_lea.hbm %s1, %s218
          %s221 = sshll.u32 %s210, 4
          %s222 = int_to_ptr.vmem [resolvable:$true] %s221
          %224 = dma.hbm_to_vmem [thread:$0]  %s219, 32, %s222, %s207
        $region24: #{tpu_custom_call.1} parent=15 // pred_fallthru
          _
      $region16: #{tpu_custom_call.1} parent=5 // pred_fallthru
        _
      %p225 = scmp.le.s32.totalorder 1, %s16
      %p226 = scmp.lt.s32.totalorder %s16, 3
      %p227 = pnand %p225, %p226
      %p228 = pneg %p227
      // Predicated region
      $region25: #{tpu_custom_call.1} parent=5 // pred_check
        _
      $region26: #{tpu_custom_call.1} parent=5 // pred_check_branch
        %230 = sbr.rel (%p227) target = $region28
      $region27: #{tpu_custom_call.1} parent=5 // pred_region
        %s231 = ssub.s32 %s16, 1
        %s232 = sand.u32 %s56, 1
        %s233 = scalar_lea.sflag [#allocation5], %s232
        %s234 = sand.u32 %s56, 1
        %s235 = smul.addr %s234, 8
        %s236 = scalar_lea.vmem [#allocation4], %s235
        // Predicated region
        $region29: #{tpu_custom_call.1} parent=27 // pred_check
          %p237 = pneg %p69
        $region30: #{tpu_custom_call.1} parent=27 // pred_check_branch
          %239 = sbr.rel (%p237) target = $region32
        $region31: #{tpu_custom_call.1} parent=27 // pred_region
          %240 = dma.done %s233, 128
        $region32: #{tpu_custom_call.1} parent=27 // pred_fallthru
          _
        %s241 = sand.u32 %s90, 1
        %s242 = scalar_lea.sflag [#allocation7], %s241
        %s243 = sand.u32 %s90, 1
        %s244 = smul.addr %s243, 2
        %s245 = scalar_lea.vmem [#allocation6], %s244
        // Predicated region
        $region33: #{tpu_custom_call.1} parent=27 // pred_check
          %p246 = pneg %p103
        $region34: #{tpu_custom_call.1} parent=27 // pred_check_branch
          %248 = sbr.rel (%p246) target = $region36
        $region35: #{tpu_custom_call.1} parent=27 // pred_region
          %249 = dma.done %s242, 32
        $region36: #{tpu_custom_call.1} parent=27 // pred_fallthru
          _
        %s250 = sand.u32 %s56, 1
        %s251 = scalar_lea.sflag [#allocation5], %s250
        %s252 = sand.u32 %s56, 1
        %s253 = smul.addr %s252, 8
        %s254 = scalar_lea.vmem [#allocation4], %s253
        %p255 = pneg %p69
        %p256 = pneg %p66
        %s257 = sand.u32 %s90, 1
        %s258 = scalar_lea.sflag [#allocation7], %s257
        %s259 = sand.u32 %s90, 1
        %s260 = smul.addr %s259, 2
        %s261 = scalar_lea.vmem [#allocation6], %s260
        %p262 = pneg %p103
        %p263 = pneg %p100
        %p264 = pneg %p131
        %p265 = pneg %p128
        %p266 = scmp.lt.s32.totalorder %s26, 1
        %s267 = scalar_select %p266, %s26, 1
        %p268 = scmp.lt.s32.totalorder %s27, 0
        %s269 = scalar_select %p268, %s27, 0
        %s270 = sadd.s32 %s269, %s267
        %s271 = scalar_lea.vmem %s2, %s270
        %p272 = pneg %p159
        %p273 = pneg %p156
        %p274 = scmp.lt.s32.totalorder %s26, 1
        %s275 = scalar_select %p274, %s26, 1
        %p276 = scmp.lt.s32.totalorder %s27, 0
        %s277 = scalar_select %p276, %s27, 0
        %s278 = sadd.s32 %s277, %s275
        %s279 = scalar_lea.vmem %s3, %s278
        %s280 = sadd.s32 %s27, %s28
        %p281 = scmp.lt.s32.totalorder %s280, 0
        %s282 = scalar_select %p281, %s280, 0
        %s283 = sadd.s32 %s27, %s28
        %p284 = scmp.lt.s32.totalorder %s283, 0
        %s285 = scalar_select %p284, %s283, 0
        %p286 = scmp.lt.s32.totalorder %s26, 1
        %s287 = scalar_select %p286, %s26, 1
        %p288 = scmp.lt.s32.totalorder %s27, 0
        %s289 = scalar_select %p288, %s27, 0
        %s290 = sadd.s32 %s289, %s287
        %s291 = scalar_lea.vmem %s2, %s290
        %p292 = scmp.lt.s32.totalorder %s26, 1
        %s293 = scalar_select %p292, %s26, 1
        %p294 = scmp.lt.s32.totalorder %s27, 0
        %s295 = scalar_select %p294, %s27, 0
        %s296 = sadd.s32 %s295, %s293
        %s297 = scalar_lea.vmem %s3, %s296
        %p298 = scmp.eq.s32.totalorder %s28, 0
        // Predicated region
        $region37: #{tpu_custom_call.1} parent=27 // pred_check
          %p299 = pneg %p298
        $region38: #{tpu_custom_call.1} parent=27 // pred_check_branch
          %301 = sbr.rel (%p299) target = $region40
        $region39: #{tpu_custom_call.1} parent=27 // pred_region
          %302 = vst [vmem:[#allocation2] sm:$0x3] 0.0
          %303 = vst [vmem:[#allocation3] sm:$0x3] 0.0
        $region40: #{tpu_custom_call.1} parent=27 // pred_fallthru
          _
        %v304 = vld [vmem:[%s245] sm:$0x3]
        %vm305 = vcmp.eq.s32.totalorder %v304, 0
        %v306 = vld [vmem:[%s236] sm:$0x3]
        %v307 = vsel %vm305, %v306, 0.0
        %vm308 = vcmp.eq.s32.totalorder %v304, 1
        %s309 = scalar_lea.vmem %s236, 2 [#allocation4]
        %v310 = vld [vmem:[%s309] sm:$0x3]
        %v311 = vsel %vm308, %v310, %v307
        %vm312 = vcmp.eq.s32.totalorder %v304, 2
        %s313 = scalar_lea.vmem %s236, 4 [#allocation4]
        %v314 = vld [vmem:[%s313] sm:$0x3]
        %v315 = vsel %vm312, %v314, %v311
        %vm316 = vcmp.eq.s32.totalorder %v304, 3
        %s317 = scalar_lea.vmem %s236, 6 [#allocation4]
        %v318 = vld [vmem:[%s317] sm:$0x3]
        %v319 = vsel %vm316, %v318, %v315
        %vm320 = vcmp.ne.s32.totalorder %v304, 255
        %v321 = vld [vmem:[#allocation2] sm:$0x3]
        %v322 = vsel %vm320, %v319, 1.0
        %v323 = vlog2.pop %v322
        %v324 = vmul.f32 %v323, 0.6931472
        %v325 = vadd.f32 %v321, %v324
        %326 = vst [vmem:[#allocation2] sm:$0x3] %v325
        %v327 = vld [vmem:[#allocation3] sm:$0x3]
        %v328 = vsel %vm320, 1, 0
        %v329 = vcvt.s32.f32 %v328
        %v330 = vadd.f32 %v327, %v329
        %331 = vst [vmem:[#allocation3] sm:$0x3] %v330
        // Predicated region
        $region41: #{tpu_custom_call.1} parent=27 // pred_check
          %p332 = pneg %p298
        $region42: #{tpu_custom_call.1} parent=27 // pred_check_branch
          %334 = sbr.rel (%p332) target = $region44
        $region43: #{tpu_custom_call.1} parent=27 // pred_region
          %v335 = vld [vmem:[#allocation2] sm:$0x3]
          %vm336 = vcmask 1041408
          %v337 = vsel %vm336, %v335, 0.0
          %338 = vadd.xlane.f32.xlu0 %v337
          %v339 = vpop.xlane.xlu0 %338
          %v340 = vrot.slane %v339, 4
          %v341 = vadd.f32 %v339, %v340
          %v342 = vrot.slane %v341, 2
          %v343 = vadd.f32 %v341, %v342
          %v344 = vrot.slane %v343, 1
          %v345 = vadd.f32 %v343, %v344
          %s346 = vtos %v345
          %v347 = vstv %s346
          %vm348 = vcmask 0
          %349 = vst.msk [vmem:[%s291] sm:$0x1] %vm348, %v347
          %v350 = vld [vmem:[#allocation3] sm:$0x3]
          %v351 = vsel %vm336, %v350, 0.0
          %352 = vadd.xlane.f32.xlu0 %v351
          %v353 = vpop.xlane.xlu0 %352
          %v354 = vrot.slane %v353, 4
          %v355 = vadd.f32 %v353, %v354
          %v356 = vrot.slane %v355, 2
          %v357 = vadd.f32 %v355, %v356
          %v358 = vrot.slane %v357, 1
          %v359 = vadd.f32 %v357, %v358
          %s360 = vtos %v359
          %v361 = vstv %s360
          %362 = vst.msk [vmem:[%s297] sm:$0x1] %vm348, %v361
        $region44: #{tpu_custom_call.1} parent=27 // pred_fallthru
          _
        %p363 = scmp.lt.s32.totalorder %s26, 1
        %s364 = scalar_select %p363, %s26, 1
        %p365 = scmp.lt.s32.totalorder %s27, 0
        %s366 = scalar_select %p365, %s27, 0
        %s367 = sadd.s32 %s366, %s364
        %s368 = scalar_lea.vmem %s2, %s367
        %p369 = scmp.lt.s32.totalorder %s26, 1
        %s370 = scalar_select %p369, %s26, 1
        %p371 = scmp.lt.s32.totalorder %s27, 0
        %s372 = scalar_select %p371, %s27, 0
        %s373 = sadd.s32 %s372, %s370
        %s374 = scalar_lea.vmem %s3, %s373
        // Predicated region
        $region45: #{tpu_custom_call.1} parent=27 // pred_check
          %p375 = pneg %p128
        $region46: #{tpu_custom_call.1} parent=27 // pred_check_branch
          %377 = sbr.rel (%p375) target = $region48
        $region47: #{tpu_custom_call.1} parent=27 // pred_region
          _
        $region48: #{tpu_custom_call.1} parent=27 // pred_fallthru
          _
        // Predicated region
        $region49: #{tpu_custom_call.1} parent=27 // pred_check
          %p378 = pneg %p156
        $region50: #{tpu_custom_call.1} parent=27 // pred_check_branch
          %380 = sbr.rel (%p378) target = $region52
        $region51: #{tpu_custom_call.1} parent=27 // pred_region
          _
        $region52: #{tpu_custom_call.1} parent=27 // pred_fallthru
          _
      $region28: #{tpu_custom_call.1} parent=5 // pred_fallthru
        _
      %p381 = scmp.le.s32.totalorder 2, %s16
      // Predicated region
      $region53: #{tpu_custom_call.1} parent=5 // pred_check
        %p382 = pneg %p381
      $region54: #{tpu_custom_call.1} parent=5 // pred_check_branch
        %384 = sbr.rel (%p382) target = $region56
      $region55: #{tpu_custom_call.1} parent=5 // pred_region
        %s385 = ssub.s32 %s16, 2
        // Predicated region
        $region57: #{tpu_custom_call.1} parent=55 // pred_check
          %p386 = pneg %p134
        $region58: #{tpu_custom_call.1} parent=55 // pred_check_branch
          %388 = sbr.rel (%p386) target = $region60
        $region59: #{tpu_custom_call.1} parent=55 // pred_region
          %p389 = scmp.lt.s32.totalorder %s29, 1
          %s390 = scalar_select %p389, %s29, 1
          %p391 = scmp.lt.s32.totalorder %s30, 0
          %s392 = scalar_select %p391, %s30, 0
          %s393 = sadd.s32 %s392, %s390
          %s394 = scalar_lea.vmem %s2, %s393
        $region60: #{tpu_custom_call.1} parent=55 // pred_fallthru
          _
        // Predicated region
        $region61: #{tpu_custom_call.1} parent=55 // pred_check
          %p395 = pneg %p162
        $region62: #{tpu_custom_call.1} parent=55 // pred_check_branch
          %397 = sbr.rel (%p395) target = $region64
        $region63: #{tpu_custom_call.1} parent=55 // pred_region
          %p398 = scmp.lt.s32.totalorder %s29, 1
          %s399 = scalar_select %p398, %s29, 1
          %p400 = scmp.lt.s32.totalorder %s30, 0
          %s401 = scalar_select %p400, %s30, 0
          %s402 = sadd.s32 %s401, %s399
          %s403 = scalar_lea.vmem %s3, %s402
        $region64: #{tpu_custom_call.1} parent=55 // pred_fallthru
          _
      $region56: #{tpu_custom_call.1} parent=5 // pred_fallthru
        _
    $region6: #{tpu_custom_call.1} parent=1 // loop_footer
      %s20 = sadd.s32 1, %s16
    $region7: #{tpu_custom_call.1} parent=1 // loop_footer_branch
      %15 = sbr.rel target = $region3
    $region8: #{tpu_custom_call.1} parent=1 // loop_exit
      _
    %404 = vsyncpa [#allocation5], 1
    %s405 = scalar_lea.sflag [#allocation5], 1
    %406 = vsyncpa %s405, 1
    %407 = vsyncpa [#allocation7], 1
    %s408 = scalar_lea.sflag [#allocation7], 1
    %409 = vsyncpa %s408, 1

</llo_original>
